<compile_context>
chip_gen: v6e
topology: v6e:2x2x1
jax: 0.10.0
libtpu: 0.0.40
codegen_flags: <defaults>
</compile_context>

<pallas_src>
import jax
import jax.numpy as jnp
from jax.experimental import pallas as pl
from jax.experimental.pallas import tpu as pltpu


def pg_forward_kernel(x_ref, w1_ref, b1_ref, w2_ref, b2_ref, out_ref):
    # x_ref: (TM, S) f32; weights unpadded, resident in VMEM.
    x = x_ref[...]                                                    # (TM, S)
    # fc1 + ReLU
    h = jnp.dot(x, w1_ref[...], preferred_element_type=jnp.float32) + b1_ref[...]
    h = jnp.maximum(h, 0.0)                                           # (TM, H)
    # fc2
    s = jnp.dot(h, w2_ref[...], preferred_element_type=jnp.float32) + b2_ref[...]
    # Numerically stable softmax over the (real, unpadded) action axis.
    m = jnp.max(s, axis=-1, keepdims=True)
    e = jnp.exp(s - m)
    denom = jnp.sum(e, axis=-1, keepdims=True)
    # Exact divide so probabilities sum to 1 (feeds log-prob / losses in RL).
    out_ref[...] = (e / denom).astype(out_ref.dtype)


def _round_up(n, m):
    return ((n + m - 1) // m) * m


def pg_network_forward(x, w1, b1, w2, b2, *, block_batch=256):
    """softmax(relu(x @ w1 + b1) @ w2 + b2, axis=1).

    x:  (B, S)   w1: (S, H)   b1: (1, H)   w2: (H, A)   b2: (1, A)
    (weights stored transposed vs. PyTorch nn.Linear, i.e. (in, out)).
    """
    B, S = x.shape
    H = w1.shape[1]
    A = w2.shape[1]

    # Batch tile: multiple of 8 (sublane), at most block_batch. Modest sizes
    # give v7x's two TensorCores several pipelined grid steps per rollout.
    tm = min(_round_up(block_batch, 8), _round_up(B, 8))
    Bp = _round_up(B, tm)

    f32 = jnp.float32
    x = x.astype(f32)
    if Bp != B:
        # Only pad batch rows (never feature lanes) and only when needed.
        xp = jnp.zeros((Bp, S), f32).at[:B, :].set(x)
    else:
        xp = x

    grid = (Bp // tm,)

    out = pl.pallas_call(
        pg_forward_kernel,
        out_shape=jax.ShapeDtypeStruct((Bp, A), f32),
        grid=grid,
        in_specs=[
            pl.BlockSpec((tm, S), lambda i: (i, 0)),   # batch tile of activations
            pl.BlockSpec((S, H), lambda i: (0, 0)),    # weights: full-extent,
            pl.BlockSpec((1, H), lambda i: (0, 0)),    # VMEM-resident across grid
            pl.BlockSpec((H, A), lambda i: (0, 0)),
            pl.BlockSpec((1, A), lambda i: (0, 0)),
        ],
        out_specs=pl.BlockSpec((tm, A), lambda i: (i, 0)),
        compiler_params=pltpu.CompilerParams(
            dimension_semantics=("parallel",),         # shard batch across TCs
        ),
    )(xp, w1.astype(f32), b1.astype(f32), w2.astype(f32), b2.astype(f32))

    return out if Bp == B else out[:B, :]


def init_params(key, state_dim, action_dim, hidden=20):
    # Deterministic init mimicking PyTorch nn.Linear default:
    # U(-1/sqrt(fan_in), 1/sqrt(fan_in)) for both weight and bias.
    k1, k2, k3, k4 = jax.random.split(key, 4)
    lim1 = 1.0 / jnp.sqrt(jnp.float32(state_dim))
    lim2 = 1.0 / jnp.sqrt(jnp.float32(hidden))
    w1 = jax.random.uniform(k1, (state_dim, hidden), jnp.float32, -lim1, lim1)
    b1 = jax.random.uniform(k2, (1, hidden), jnp.float32, -lim1, lim1)
    w2 = jax.random.uniform(k3, (hidden, action_dim), jnp.float32, -lim2, lim2)
    b2 = jax.random.uniform(k4, (1, action_dim), jnp.float32, -lim2, lim2)
    return w1, b1, w2, b2


def reference_forward(x, w1, b1, w2, b2):
    h = jnp.maximum(x @ w1 + b1, 0.0)
    s = h @ w2 + b2
    return jax.nn.softmax(s, axis=1)


if __name__ == "__main__":
    key = jax.random.PRNGKey(0)
    kx, kp, kx2 = jax.random.split(key, 3)

    batch, state_dim, action_dim = 8, 4, 2   # CartPole-ish dims
    x = jax.random.normal(kx, (batch, state_dim), dtype=jnp.float32)
    w1, b1, w2, b2 = init_params(kp, state_dim, action_dim)

    # Small per-step inference call (single grid step, no padding at all).
    out = pg_network_forward(x, w1, b1, w2, b2)
    out = jax.block_until_ready(out)
    ref = reference_forward(x, w1, b1, w2, b2)
    assert out.shape == (batch, action_dim)
    assert jnp.allclose(out, ref, atol=1e-5, rtol=1e-5)
    assert jnp.allclose(jnp.sum(out, axis=1), 1.0, atol=1e-5)

    # Batched rollout call: exercises the multi-step grid + resident weights.
    big_batch = 1024
    xb = jax.random.normal(kx2, (big_batch, state_dim), dtype=jnp.float32)
    out_b = pg_network_forward(xb, w1, b1, w2, b2, block_batch=256)
    out_b = jax.block_until_ready(out_b)
    ref_b = reference_forward(xb, w1, b1, w2, b2)
    assert out_b.shape == (big_batch, action_dim)
    assert jnp.allclose(out_b, ref_b, atol=1e-5, rtol=1e-5)
    assert jnp.allclose(jnp.sum(out_b, axis=1), 1.0, atol=1e-5)

    print("KERNEL_OK")
</pallas_src>

<mosaic_0001>
module attributes {stable_mosaic.version = 11 : i64} {
  func.func @pg_forward_kernel(%arg0: i32, %arg1: memref<8x4xf32, #tpu.memory_space<vmem>>, %arg2: memref<4x20xf32, #tpu.memory_space<vmem>>, %arg3: memref<1x20xf32, #tpu.memory_space<vmem>>, %arg4: memref<20x2xf32, #tpu.memory_space<vmem>>, %arg5: memref<1x2xf32, #tpu.memory_space<vmem>>, %arg6: memref<8x2xf32, #tpu.memory_space<vmem>>) attributes {dimension_semantics = [#tpu.dimension_semantics<parallel>], iteration_bounds = array<i64: 1>, scalar_prefetch = 0 : i64, scratch_operands = 0 : i64, tpu.core_type = #tpu.core_type<tc>, window_params = [{transform_indices = @transform_0, window_bounds = array<i64: 8, 4>}, {pipeline_mode = #tpu.pipeline_mode<synchronous>, transform_indices = @transform_1, window_bounds = array<i64: 4, 20>}, {pipeline_mode = #tpu.pipeline_mode<synchronous>, transform_indices = @transform_2, window_bounds = array<i64: 1, 20>}, {pipeline_mode = #tpu.pipeline_mode<synchronous>, transform_indices = @transform_3, window_bounds = array<i64: 20, 2>}, {pipeline_mode = #tpu.pipeline_mode<synchronous>, transform_indices = @transform_4, window_bounds = array<i64: 1, 2>}, {transform_indices = @transform_5, window_bounds = array<i64: 8, 2>}]} {
    %c0 = arith.constant 0 : index
    %c0_0 = arith.constant 0 : index
    %0 = vector.load %arg1[%c0, %c0_0] : memref<8x4xf32, #tpu.memory_space<vmem>>, vector<8x4xf32>
    %c0_1 = arith.constant 0 : index
    %c0_2 = arith.constant 0 : index
    %1 = vector.load %arg2[%c0_1, %c0_2] : memref<4x20xf32, #tpu.memory_space<vmem>>, vector<4x20xf32>
    %cst = arith.constant dense<0.000000e+00> : vector<8x20xf32>
    %2 = tpu.matmul %0, %1, %cst {dimension_numbers = #tpu.dot_dimension_numbers<[1], [0], [0], [1], [0, 0, 1, 1], [], []>} : vector<8x4xf32>, vector<4x20xf32>, vector<8x20xf32> -> vector<8x20xf32>
    %c0_3 = arith.constant 0 : index
    %c0_4 = arith.constant 0 : index
    %3 = vector.load %arg3[%c0_3, %c0_4] : memref<1x20xf32, #tpu.memory_space<vmem>>, vector<1x20xf32>
    %4 = vector.broadcast %3 : vector<1x20xf32> to vector<8x20xf32>
    %5 = arith.addf %2, %4 : vector<8x20xf32>
    %cst_5 = arith.constant 0.000000e+00 : f32
    %6 = vector.broadcast %cst_5 : f32 to vector<8x20xf32>
    %7 = arith.maximumf %5, %6 : vector<8x20xf32>
    %c0_6 = arith.constant 0 : index
    %c0_7 = arith.constant 0 : index
    %8 = vector.load %arg4[%c0_6, %c0_7] : memref<20x2xf32, #tpu.memory_space<vmem>>, vector<20x2xf32>
    %cst_8 = arith.constant dense<0.000000e+00> : vector<8x2xf32>
    %9 = tpu.matmul %7, %8, %cst_8 {dimension_numbers = #tpu.dot_dimension_numbers<[1], [0], [0], [1], [0, 0, 1, 1], [], []>} : vector<8x20xf32>, vector<20x2xf32>, vector<8x2xf32> -> vector<8x2xf32>
    %c0_9 = arith.constant 0 : index
    %c0_10 = arith.constant 0 : index
    %10 = vector.load %arg5[%c0_9, %c0_10] : memref<1x2xf32, #tpu.memory_space<vmem>>, vector<1x2xf32>
    %11 = vector.broadcast %10 : vector<1x2xf32> to vector<8x2xf32>
    %12 = arith.addf %9, %11 : vector<8x2xf32>
    %cst_11 = arith.constant dense<0xFF800000> : vector<8xf32>
    %13 = vector.multi_reduction <maximumf>, %12, %cst_11 [1] : vector<8x2xf32> to vector<8xf32>
    %14 = vector.shape_cast %13 : vector<8xf32> to vector<8x1xf32>
    %15 = vector.broadcast %14 : vector<8x1xf32> to vector<8x2xf32>
    %16 = arith.subf %12, %15 : vector<8x2xf32>
    %17 = math.exp %16 : vector<8x2xf32>
    %cst_12 = arith.constant dense<0.000000e+00> : vector<8xf32>
    %18 = vector.multi_reduction <add>, %17, %cst_12 [1] : vector<8x2xf32> to vector<8xf32>
    %19 = vector.shape_cast %18 : vector<8xf32> to vector<8x1xf32>
    %20 = vector.broadcast %19 : vector<8x1xf32> to vector<8x2xf32>
    %21 = arith.divf %17, %20 : vector<8x2xf32>
    %c0_13 = arith.constant 0 : index
    %c0_14 = arith.constant 0 : index
    %22 = vector.load %arg6[%c0_13, %c0_14] : memref<8x2xf32, #tpu.memory_space<vmem>>, vector<8x2xf32>
    tpu.vector_store %arg6[%c0_13, %c0_14], %21 {strides = array<i32>} : memref<8x2xf32, #tpu.memory_space<vmem>>, vector<8x2xf32>,
    return
  }
  func.func @transform_0(%arg0: i32) -> (i32, i32) {
    %c0_i32 = arith.constant 0 : i32
    %c0_i32_0 = arith.constant 0 : i32
    return %arg0, %c0_i32 : i32, i32
  }
  func.func @transform_1(%arg0: i32) -> (i32, i32) {
    %c0_i32 = arith.constant 0 : i32
    %c0_i32_0 = arith.constant 0 : i32
    %c0_i32_1 = arith.constant 0 : i32
    return %c0_i32, %c0_i32_0 : i32, i32
  }
  func.func @transform_2(%arg0: i32) -> (i32, i32) {
    %c0_i32 = arith.constant 0 : i32
    %c0_i32_0 = arith.constant 0 : i32
    %c0_i32_1 = arith.constant 0 : i32
    return %c0_i32, %c0_i32_0 : i32, i32
  }
  func.func @transform_3(%arg0: i32) -> (i32, i32) {
    %c0_i32 = arith.constant 0 : i32
    %c0_i32_0 = arith.constant 0 : i32
    %c0_i32_1 = arith.constant 0 : i32
    return %c0_i32, %c0_i32_0 : i32, i32
  }
  func.func @transform_4(%arg0: i32) -> (i32, i32) {
    %c0_i32 = arith.constant 0 : i32
    %c0_i32_0 = arith.constant 0 : i32
    %c0_i32_1 = arith.constant 0 : i32
    return %c0_i32, %c0_i32_0 : i32, i32
  }
  func.func @transform_5(%arg0: i32) -> (i32, i32) {
    %c0_i32 = arith.constant 0 : i32
    %c0_i32_0 = arith.constant 0 : i32
    return %arg0, %c0_i32 : i32, i32
  }
}

</mosaic_0001>

<llo_original>
// kernel: tpu_custom_call.1
$region0: #{tpu_custom_call.1}
  #allocation0 [shape = 'u32[]', space=smem, size = 0x4, offset = 0x4, fixed_abs, tag = 'smem constant byte address 0x4 - core index']
  #allocation1 [shape = 'u32[144,128]{1,0:T(1,128)}', space=vmem, size = 0x12000, scoped, tag = 'internal scratch']
  %s0 = inlined_call_operand.vmem [shape: f32[8,4], index: 0, kind: input, shape index: {}]
  %s1 = inlined_call_operand.vmem [shape: f32[4,20], index: 1, kind: input, shape index: {}]
  %s2 = inlined_call_operand.vmem [shape: f32[1,20], index: 2, kind: input, shape index: {}]
  %s3 = inlined_call_operand.vmem [shape: f32[20,2], index: 3, kind: input, shape index: {}]
  %s4 = inlined_call_operand.vmem [shape: f32[1,2], index: 4, kind: input, shape index: {}]
  %s5 = inlined_call_operand.vmem [shape: f32[8,2], index: 5, kind: output, shape index: {}]
  %s6 = sld [smem:[#allocation0]]
  $region30: #{tpu_custom_call.1} parent=0
    _
  %s8 = ssub.s32 1, %s6
  %s9 = scalar_select 0, %s8, %s6
  // Predicated region
  $region2: #{tpu_custom_call.1} parent=0 // pred_check
    _
  $region3: #{tpu_custom_call.1} parent=0 // pred_check_branch
    %11 = sbr.rel (0) target = $region5
  $region4: #{tpu_custom_call.1} parent=0 // pred_region
    _
  $region5: #{tpu_custom_call.1} parent=0 // pred_fallthru
    _
  // Predicated region
  $region6: #{tpu_custom_call.1} parent=0 // pred_check
    _
  $region7: #{tpu_custom_call.1} parent=0 // pred_check_branch
    %13 = sbr.rel (0) target = $region9
  $region8: #{tpu_custom_call.1} parent=0 // pred_region
    _
  $region9: #{tpu_custom_call.1} parent=0 // pred_fallthru
    _
  // Predicated region
  $region10: #{tpu_custom_call.1} parent=0 // pred_check
    _
  $region11: #{tpu_custom_call.1} parent=0 // pred_check_branch
    %15 = sbr.rel (0) target = $region13
  $region12: #{tpu_custom_call.1} parent=0 // pred_region
    _
  $region13: #{tpu_custom_call.1} parent=0 // pred_fallthru
    _
  // Predicated region
  $region14: #{tpu_custom_call.1} parent=0 // pred_check
    _
  $region15: #{tpu_custom_call.1} parent=0 // pred_check_branch
    %17 = sbr.rel (0) target = $region17
  $region16: #{tpu_custom_call.1} parent=0 // pred_region
    _
  $region17: #{tpu_custom_call.1} parent=0 // pred_fallthru
    _
  // Predicated region
  $region18: #{tpu_custom_call.1} parent=0 // pred_check
    _
  $region19: #{tpu_custom_call.1} parent=0 // pred_check_branch
    %19 = sbr.rel (0) target = $region21
  $region20: #{tpu_custom_call.1} parent=0 // pred_region
    _
  $region21: #{tpu_custom_call.1} parent=0 // pred_fallthru
    _
  %v20 = vld [vmem:[%s0] sm:$0xff]
  %v21 = vld [vmem:[%s1] sm:$0xf]
  %v22 = vld [vmem:[%s2] sm:$0x1]
  %v24 = vlaneseq
  %v25 = vshrl.u32 %v24, 7
  %v26 = vsub.s32 0, %v25
  %v27 = vrot.slane %v22, %v26
  %vm29 = vcmask 31744
  %v31 = vsel %vm29, %v20, 0
  %vm33 = vcmask 1043456
  %v35 = vsel %vm33, %v21, 0
  %37 = vmatprep.subr.mxu0 0.0
  %38 = vmatpush1.msra.mxu0 0.0
  %39 = vmatprep.subr.mxu0 0.0
  %40 = vmatpush1.msra.mxu0 0.0
  %41 = vmatprep.subr.mxu0 0.0
  %42 = vmatpush1.msra.mxu0 0.0
  %43 = vmatprep.subr.mxu0 0.0
  %44 = vmatpush1.msra.mxu0 0.0
  %45 = vmatprep.subr.mxu0 0.0
  %46 = vmatpush1.msra.mxu0 0.0
  %47 = vmatprep.subr.mxu0 0.0
  %48 = vmatpush1.msra.mxu0 0.0
  %49 = vmatprep.subr.mxu0 0.0
  %50 = vmatpush1.msra.mxu0 0.0
  %51 = vmatprep.subr.mxu0 0.0
  %52 = vmatpush1.msra.mxu0 0.0
  %53 = vmatprep.subr.mxu0 0.0
  %54 = vmatpush1.msra.mxu0 0.0
  %55 = vmatprep.subr.mxu0 0.0
  %56 = vmatpush1.msra.mxu0 0.0
  %57 = vmatprep.subr.mxu0 0.0
  %58 = vmatpush1.msra.mxu0 0.0
  %59 = vmatprep.subr.mxu0 0.0
  %60 = vmatpush1.msra.mxu0 0.0
  %61 = vmatprep.subr.mxu0 0.0
  %62 = vmatpush1.msra.mxu0 0.0
  %63 = vmatprep.subr.mxu0 0.0
  %64 = vmatpush1.msra.mxu0 0.0
  %65 = vmatprep.subr.mxu0 0.0
  %66 = vmatpush1.msra.mxu0 0.0
  %67 = vmatprep.subr.mxu0 0.0
  %68 = vmatpush1.msra.mxu0 %v35
  %69 = vmatprep.subr.mxu0 0.0
  %70 = vmatpush2.msra.mxu0 0.0
  %71 = vmatprep.subr.mxu0 0.0
  %72 = vmatpush2.msra.mxu0 0.0
  %73 = vmatprep.subr.mxu0 0.0
  %74 = vmatpush2.msra.mxu0 0.0
  %75 = vmatprep.subr.mxu0 0.0
  %76 = vmatpush2.msra.mxu0 0.0
  %77 = vmatprep.subr.mxu0 0.0
  %78 = vmatpush2.msra.mxu0 0.0
  %79 = vmatprep.subr.mxu0 0.0
  %80 = vmatpush2.msra.mxu0 0.0
  %81 = vmatprep.subr.mxu0 0.0
  %82 = vmatpush2.msra.mxu0 0.0
  %83 = vmatprep.subr.mxu0 0.0
  %84 = vmatpush2.msra.mxu0 0.0
  %85 = vmatprep.subr.mxu0 0.0
  %86 = vmatpush2.msra.mxu0 0.0
  %87 = vmatprep.subr.mxu0 0.0
  %88 = vmatpush2.msra.mxu0 0.0
  %89 = vmatprep.subr.mxu0 0.0
  %90 = vmatpush2.msra.mxu0 0.0
  %91 = vmatprep.subr.mxu0 0.0
  %92 = vmatpush2.msra.mxu0 0.0
  %93 = vmatprep.subr.mxu0 0.0
  %94 = vmatpush2.msra.mxu0 0.0
  %95 = vmatprep.subr.mxu0 0.0
  %96 = vmatpush2.msra.mxu0 0.0
  %97 = vmatprep.subr.mxu0 0.0
  %98 = vmatpush2.msra.mxu0 0.0
  %99 = vmatprep.subr.mxu0 0.0
  %100 = vmatpush2.msra.mxu0 0.0
  %101 = vmatprep.mubr.f32.mxu0 0.0
  %102 = vmatmul.mubr.f32.gmra.mxu0 %v31
  %v103 = vpop.f32.mrf.mxu0
  %v104 = vadd.f32 %v27, %v103
  %v105 = vpop.f32.mrf.mxu0
  %106 = vdwg.mxu0
  %v107 = vmax.f32 %v104, 0.0
  %v108 = vld [vmem:[%s3] sm:$0xff]
  %v109 = vld [vmem:[%s3 + $0x8] sm:$0xff]
  %v110 = vld [vmem:[%s3 + $0x10] sm:$0xf]
  %v111 = vld [vmem:[%s4] sm:$0x1]
  %v113 = vlaneseq
  %v114 = vshrl.u32 %v113, 7
  %v115 = vsub.s32 0, %v114
  %v116 = vrot.slane %v111, %v115
  %vm118 = vcmask 162816
  %v120 = vsel %vm118, %v107, 0
  %v123 = vsel %vm33, %v110, 0
  %125 = vmatprep.subr.mxu0 0.0
  %126 = vmatpush1.msra.mxu0 0.0
  %127 = vmatprep.subr.mxu0 0.0
  %128 = vmatpush1.msra.mxu0 0.0
  %129 = vmatprep.subr.mxu0 0.0
  %130 = vmatpush1.msra.mxu0 0.0
  %131 = vmatprep.subr.mxu0 0.0
  %132 = vmatpush1.msra.mxu0 0.0
  %133 = vmatprep.subr.mxu0 0.0
  %134 = vmatpush1.msra.mxu0 0.0
  %135 = vmatprep.subr.mxu0 0.0
  %136 = vmatpush1.msra.mxu0 0.0
  %137 = vmatprep.subr.mxu0 0.0
  %138 = vmatpush1.msra.mxu0 0.0
  %139 = vmatprep.subr.mxu0 0.0
  %140 = vmatpush1.msra.mxu0 0.0
  %141 = vmatprep.subr.mxu0 0.0
  %142 = vmatpush1.msra.mxu0 0.0
  %143 = vmatprep.subr.mxu0 0.0
  %144 = vmatpush1.msra.mxu0 0.0
  %145 = vmatprep.subr.mxu0 0.0
  %146 = vmatpush1.msra.mxu0 0.0
  %147 = vmatprep.subr.mxu0 0.0
  %148 = vmatpush1.msra.mxu0 0.0
  %149 = vmatprep.subr.mxu0 0.0
  %150 = vmatpush1.msra.mxu0 0.0
  %151 = vmatprep.subr.mxu0 0.0
  %152 = vmatpush1.msra.mxu0 %v123
  %153 = vmatprep.subr.mxu0 0.0
  %154 = vmatpush1.msra.mxu0 %v109
  %155 = vmatprep.subr.mxu0 0.0
  %156 = vmatpush1.msra.mxu0 %v108
  %157 = vmatprep.subr.mxu0 0.0
  %158 = vmatpush2.msra.mxu0 0.0
  %159 = vmatprep.subr.mxu0 0.0
  %160 = vmatpush2.msra.mxu0 0.0
  %161 = vmatprep.subr.mxu0 0.0
  %162 = vmatpush2.msra.mxu0 0.0
  %163 = vmatprep.subr.mxu0 0.0
  %164 = vmatpush2.msra.mxu0 0.0
  %165 = vmatprep.subr.mxu0 0.0
  %166 = vmatpush2.msra.mxu0 0.0
  %167 = vmatprep.subr.mxu0 0.0
  %168 = vmatpush2.msra.mxu0 0.0
  %169 = vmatprep.subr.mxu0 0.0
  %170 = vmatpush2.msra.mxu0 0.0
  %171 = vmatprep.subr.mxu0 0.0
  %172 = vmatpush2.msra.mxu0 0.0
  %173 = vmatprep.subr.mxu0 0.0
  %174 = vmatpush2.msra.mxu0 0.0
  %175 = vmatprep.subr.mxu0 0.0
  %176 = vmatpush2.msra.mxu0 0.0
  %177 = vmatprep.subr.mxu0 0.0
  %178 = vmatpush2.msra.mxu0 0.0
  %179 = vmatprep.subr.mxu0 0.0
  %180 = vmatpush2.msra.mxu0 0.0
  %181 = vmatprep.subr.mxu0 0.0
  %182 = vmatpush2.msra.mxu0 0.0
  %183 = vmatprep.subr.mxu0 0.0
  %184 = vmatpush2.msra.mxu0 0.0
  %185 = vmatprep.subr.mxu0 0.0
  %186 = vmatpush2.msra.mxu0 0.0
  %187 = vmatprep.subr.mxu0 0.0
  %188 = vmatpush2.msra.mxu0 0.0
  %189 = vmatprep.mubr.f32.mxu0 0.0
  %190 = vmatmul.mubr.f32.gmra.mxu0 %v120
  %v191 = vpop.f32.mrf.mxu0
  %v192 = vadd.f32 %v116, %v191
  %v193 = vpop.f32.mrf.mxu0
  %194 = vdwg.mxu0
  %vm195 = vcmask 15360
  %v196 = vsel %vm195, %v192, -inf
  %197 = vmax.xlane.f32.xlu0 %v196
  %v198 = vpop.xlane.xlu0 %197
  %v199 = vsub.f32 %v192, %v198
  %v200 = vmul.f32 %v199, 1.442695
  %v201 = vpow.pop %v200
  %v202 = vsel %vm195, %v201, 0.0
  %203 = vadd.xlane.f32.xlu0 %v202
  %v204 = vpop.xlane.xlu0 %203
  %v205 = vrcp.pop %v204
  %v206 = vmul.f32 %v201, %v205
  %207 = vst.msk [vmem:[%s5] sm:$0xff] %vm195, %v206
  // Predicated region
  $region22: #{tpu_custom_call.1} parent=0 // pred_check
    _
  $region23: #{tpu_custom_call.1} parent=0 // pred_check_branch
    %209 = sbr.rel (0) target = $region25
  $region24: #{tpu_custom_call.1} parent=0 // pred_region
    _
  $region25: #{tpu_custom_call.1} parent=0 // pred_fallthru
    _
  // Predicated region
  $region26: #{tpu_custom_call.1} parent=0 // pred_check
    _
  $region27: #{tpu_custom_call.1} parent=0 // pred_check_branch
    %211 = sbr.rel (0) target = $region29
  $region28: #{tpu_custom_call.1} parent=0 // pred_region
    _
  $region29: #{tpu_custom_call.1} parent=0 // pred_fallthru
    _

</llo_original>
